<compile_context>
chip_gen: v6e
topology: v6e:2x2x1
jax: 0.10.0
libtpu: 0.0.40
codegen_flags: <defaults>
</compile_context>

<pallas_src>
import jax
import jax.numpy as jnp
from jax.experimental import pallas as pl
from jax.experimental.pallas import tpu as pltpu

LANES = 128                  # vreg lane width
SUBLANES = 8                 # vreg sublane count (f32)
ALIGN = SUBLANES * LANES     # 1024: minimal pad granularity for an (8,128)-tiled slab
MAX_TILE_ROWS = 2048         # (2048,128) f32 = 1 MiB/buffer; 4 MiB total double-buffered
MIN_GRID_BLOCKS = 4          # keep >=4 blocks so v7x megacore can shard rows across 2 TCs
MIN_PALLAS_ELEMS = 1 << 19   # ~512K elems: below this the fused-XLA path wins


def _linreg_kernel(w_ref, b_ref, x_ref, o_ref):
    # w_ref, b_ref: (1,1) scalars in SMEM. x_ref/o_ref: (tile_rows, 128) VMEM tiles.
    w = w_ref[0, 0]
    b = b_ref[0, 0]
    o_ref[...] = x_ref[...] * w + b


def _choose_tile_rows(rows):
    # Multiple of 8, capped at MAX_TILE_ROWS, small enough to keep >= MIN_GRID_BLOCKS blocks.
    target = pl.cdiv(rows, MIN_GRID_BLOCKS)
    target = ((target + SUBLANES - 1) // SUBLANES) * SUBLANES
    return max(SUBLANES, min(MAX_TILE_ROWS, rows, target))


def _linreg_pallas_2d(x2d, w2d, b2d):
    rows, lanes = x2d.shape
    tile_rows = _choose_tile_rows(rows)
    grid = (pl.cdiv(rows, tile_rows),)   # ragged last block handled by Pallas masking
    n_elems = rows * lanes
    return pl.pallas_call(
        _linreg_kernel,
        out_shape=jax.ShapeDtypeStruct((rows, lanes), jnp.float32),
        grid=grid,
        in_specs=[
            pl.BlockSpec(memory_space=pltpu.SMEM),                 # weight scalar
            pl.BlockSpec(memory_space=pltpu.SMEM),                 # bias scalar
            pl.BlockSpec((tile_rows, lanes), lambda i: (i, 0)),    # input tile
        ],
        out_specs=pl.BlockSpec((tile_rows, lanes), lambda i: (i, 0)),
        compiler_params=pltpu.CompilerParams(
            dimension_semantics=("parallel",),
        ),
        cost_estimate=pl.CostEstimate(
            flops=2 * n_elems, bytes_accessed=8 * n_elems, transcendentals=0),
    )(w2d, b2d, x2d)


def linear_regression(x, weight, bias, *, force_pallas=False):
    """x: (B, 1) f32, weight: (1, 1) f32, bias: (1,) f32 -> (B, 1) f32."""
    B = x.shape[0]
    x = x.astype(jnp.float32)
    w_scalar = weight.reshape(()).astype(jnp.float32)
    b_scalar = bias.reshape(()).astype(jnp.float32)

    n = B * 1  # total elements (in_features == 1)

    # Small/mid batches: XLA's fused affine hits HBM roofline in one pass with no
    # pad / launch overhead; Pallas only pays off for large slabs.
    if n < MIN_PALLAS_ELEMS and not force_pallas:
        return (x * w_scalar + b_scalar).reshape(B, 1)

    w2d = w_scalar.reshape(1, 1)
    b2d = b_scalar.reshape(1, 1)
    flat = x.reshape(-1)

    if n % ALIGN == 0:
        # Aligned: pure reshape (free view), no pad, no trailing slice -> 2N bytes HBM.
        x2d = flat.reshape(n // LANES, LANES)
        out2d = _linreg_pallas_2d(x2d, w2d, b2d)
        return out2d.reshape(B, 1)

    # Ragged: pad only to the minimal (8,128) granularity; ragged last grid block is
    # masked by Pallas (block rows stay a multiple of 8, lanes = 128).
    n_pad = pl.cdiv(n, ALIGN) * ALIGN
    flat = jnp.pad(flat, (0, n_pad - n))
    x2d = flat.reshape(n_pad // LANES, LANES)
    out2d = _linreg_pallas_2d(x2d, w2d, b2d)
    return out2d.reshape(-1)[:n].reshape(B, 1)


if __name__ == "__main__":
    key = jax.random.PRNGKey(0)
    kx1, kx2, kx3, kw, kb = jax.random.split(key, 5)

    # Deterministic parameter init (mimics nn.Linear(1,1): uniform(-1,1) since fan_in=1)
    weight = jax.random.uniform(kw, (1, 1), jnp.float32, minval=-1.0, maxval=1.0)
    bias = jax.random.uniform(kb, (1,), jnp.float32, minval=-1.0, maxval=1.0)

    # 1) Small batch (matches original spec usage): fused-JAX fast path.
    x_small = jax.random.normal(kx1, (8, 1), jnp.float32)
    out_small = jax.block_until_ready(linear_regression(x_small, weight, bias))
    ref_small = x_small @ weight.T + bias
    assert out_small.shape == (8, 1)
    assert jnp.allclose(out_small, ref_small, atol=1e-6)

    # 2) Aligned batch (multiple of 1024): zero-pad/zero-slice Pallas path, 4 grid blocks.
    B_aligned = 131_072
    x_al = jax.random.normal(kx2, (B_aligned, 1), jnp.float32)
    out_al = jax.block_until_ready(
        linear_regression(x_al, weight, bias, force_pallas=True))
    ref_al = x_al @ weight.T + bias
    assert out_al.shape == (B_aligned, 1)
    assert jnp.allclose(out_al, ref_al, atol=1e-5)

    # 3) Ragged batch: minimal (8,128) pad + ragged last grid block.
    B_ragged = 100_000
    x_rg = jax.random.normal(kx3, (B_ragged, 1), jnp.float32)
    out_rg = jax.block_until_ready(
        linear_regression(x_rg, weight, bias, force_pallas=True))
    ref_rg = x_rg @ weight.T + bias
    assert out_rg.shape == (B_ragged, 1)
    assert jnp.allclose(out_rg, ref_rg, atol=1e-5)

    print("KERNEL_OK")
</pallas_src>

<mosaic_0001>
module attributes {stable_mosaic.version = 11 : i64} {
  func.func @_linreg_kernel(%arg0: i32, %arg1: memref<1x1xf32, #tpu.memory_space<smem>>, %arg2: memref<1x1xf32, #tpu.memory_space<smem>>, %arg3: memref<256x128xf32, #tpu.memory_space<vmem>>, %arg4: memref<256x128xf32, #tpu.memory_space<vmem>>) attributes {dimension_semantics = [#tpu.dimension_semantics<parallel>], iteration_bounds = array<i64: 4>, scalar_prefetch = 0 : i64, scratch_operands = 0 : i64, tpu.core_type = #tpu.core_type<tc>, window_params = [{transform_indices = @transform_0, window_bounds = array<i64: 1, 1>}, {transform_indices = @transform_1, window_bounds = array<i64: 1, 1>}, {transform_indices = @transform_2, window_bounds = array<i64: 256, 128>}, {transform_indices = @transform_3, window_bounds = array<i64: 256, 128>}]} {
    %c0 = arith.constant 0 : index
    %c0_0 = arith.constant 0 : index
    %0 = memref.load %arg1[%c0, %c0_0] : memref<1x1xf32, #tpu.memory_space<smem>>
    %c0_1 = arith.constant 0 : index
    %c0_2 = arith.constant 0 : index
    %1 = memref.load %arg2[%c0_1, %c0_2] : memref<1x1xf32, #tpu.memory_space<smem>>
    %c0_3 = arith.constant 0 : index
    %c0_4 = arith.constant 0 : index
    %2 = vector.load %arg3[%c0_3, %c0_4] : memref<256x128xf32, #tpu.memory_space<vmem>>, vector<256x128xf32>
    %3 = vector.broadcast %0 : f32 to vector<256x128xf32>
    %4 = arith.mulf %2, %3 : vector<256x128xf32>
    %5 = vector.broadcast %1 : f32 to vector<256x128xf32>
    %6 = arith.addf %4, %5 : vector<256x128xf32>
    %c0_5 = arith.constant 0 : index
    %c0_6 = arith.constant 0 : index
    %7 = vector.load %arg4[%c0_5, %c0_6] : memref<256x128xf32, #tpu.memory_space<vmem>>, vector<256x128xf32>
    tpu.vector_store %arg4[%c0_5, %c0_6], %6 {strides = array<i32>} : memref<256x128xf32, #tpu.memory_space<vmem>>, vector<256x128xf32>,
    return
  }
  func.func @transform_0(%arg0: i32) -> (i32, i32) {
    %c0_i32 = arith.constant 0 : i32
    %c0_i32_0 = arith.constant 0 : i32
    %c0_i32_1 = arith.constant 0 : i32
    return %c0_i32, %c0_i32_0 : i32, i32
  }
  func.func @transform_1(%arg0: i32) -> (i32, i32) {
    %c0_i32 = arith.constant 0 : i32
    %c0_i32_0 = arith.constant 0 : i32
    %c0_i32_1 = arith.constant 0 : i32
    return %c0_i32, %c0_i32_0 : i32, i32
  }
  func.func @transform_2(%arg0: i32) -> (i32, i32) {
    %c0_i32 = arith.constant 0 : i32
    %c0_i32_0 = arith.constant 0 : i32
    return %arg0, %c0_i32 : i32, i32
  }
  func.func @transform_3(%arg0: i32) -> (i32, i32) {
    %c0_i32 = arith.constant 0 : i32
    %c0_i32_0 = arith.constant 0 : i32
    return %arg0, %c0_i32 : i32, i32
  }
}

</mosaic_0001>

<llo_original>
// kernel: tpu_custom_call.1
$region0: #{tpu_custom_call.1}
  #allocation0 [shape = 'u32[]', space=smem, size = 0x4, offset = 0x4, fixed_abs, tag = 'smem constant byte address 0x4 - core index']
  #allocation1 [shape = 'u32[144,128]{1,0:T(1,128)}', space=vmem, size = 0x12000, scoped, tag = 'internal scratch']
  #allocation2 [shape = 'f32[1,1]{1,0:T(1,128)S(6)}', space=smem, size = 0x200, scoped, tag = 'scoped memory for tpu_custom_call.1']
  #allocation3 [shape = 'f32[1,1]{1,0:T(1,128)S(6)}', space=smem, size = 0x200, scoped, tag = 'scoped memory for tpu_custom_call.1']
  %s0 = inlined_call_operand.<no memory space> [shape: f32[1,1], index: 0, kind: input, shape index: {}]
  %s1 = inlined_call_operand.<no memory space> [shape: f32[1,1], index: 1, kind: input, shape index: {}]
  %s2 = inlined_call_operand.hbm [shape: f32[1024,128], index: 2, kind: input, shape index: {}]
  %s3 = inlined_call_operand.hbm [shape: f32[1024,128], index: 3, kind: output, shape index: {}]
  %s4 = sld [smem:[#allocation0]]
  $region49: #{tpu_custom_call.1} parent=0
    _
  %s6 = ssub.s32 1, %s4
  %s7 = scalar_select 0, %s6, %s4
  %8 = sst [smem:[#allocation2]] %s0
  %9 = sst [smem:[#allocation3]] %s1
  $region1: #{tpu_custom_call.1} parent=0
    #allocation4 [shape = 'u8[262144]{0}', space=vmem, size = 0x40000, scoped, tag = 'input window, operand 2']
    #allocation5 [shape = 's32[2]{0}', space=sflag, size = 0x8, scoped, tag = 'scoped memory for tpu_custom_call.1']
    #allocation6 [shape = 's32[2]{0}', space=sflag, size = 0x8, scoped, tag = 'scoped memory for tpu_custom_call.1']
    #allocation7 [shape = 'u8[262144]{0}', space=vmem, size = 0x40000, scoped, tag = 'output window, operand 0']
    %10 = vsyncpa [#allocation5], 0
    %s11 = scalar_lea.sflag [#allocation5], 1
    %12 = vsyncpa %s11, 0
    %13 = vsyncpa [#allocation6], 0
    %s14 = scalar_lea.sflag [#allocation6], 1
    %15 = vsyncpa %s14, 0
    loop: start=0, step=1, limit=6
    $region2: #{tpu_custom_call.1} parent=1 // loop_pre_header
      _
    $region3: #{tpu_custom_call.1} parent=1 // loop_header
      %s17 = sphi 0, %s21
      %p18 = scmp.ge.s32.totalorder %s17, 6
      %s25 = sphi 0, %s25
      %s27 = sphi 0, %s25
      %s28 = sphi 0, %s27
      %s42 = sphi 0, %s28
      %s46 = sphi 0, %s46
      %s48 = sphi 0, %s46
      %s49 = sphi 0, %s48
      %s63 = sphi 0, %s49
      %s69 = sphi 0, %s71
      %s72 = sphi 0, %s69
      %s73 = sphi 0, %s72
      %s89 = sphi 0, %s73
      %s95 = sphi 0, %s97
      %s98 = sphi 0, %s95
      %s99 = sphi 0, %s98
      %s115 = sphi 0, %s99
    $region4: #{tpu_custom_call.1} parent=1 // loop_header_branch
      %20 = sbr.rel (%p18) target = $region8
    $region5: #{tpu_custom_call.1} parent=1 // loop_body
      %s22 = ssub.s32 %s17, 1
      %s23 = ssub.s32 %s17, 2
      %s24 = sadd.s32 %s17, 1
      %s26 = sadd.s32 %s25, 1
      %p29 = scmp.eq.s32.totalorder %s17, 3
      %p30 = scmp.ne.s32.totalorder %s25, %s27
      %p31 = scmp.eq.s32.totalorder %s17, 0
      %p32 = por %p30, %p31
      %p33 = scmp.ne.s32.totalorder %s25, %s27
      %p34 = scmp.eq.s32.totalorder %s22, 3
      %p35 = por %p33, %p34
      %p36 = scmp.ne.s32.totalorder %s27, %s28
      %p37 = scmp.eq.s32.totalorder %s22, 0
      %p38 = por %p36, %p37
      %p39 = scmp.ne.s32.totalorder %s27, %s28
      %p40 = scmp.eq.s32.totalorder %s23, 3
      %p41 = por %p39, %p40
      %p43 = scmp.ne.s32.totalorder %s28, %s42
      %p44 = scmp.eq.s32.totalorder %s23, 0
      %p45 = por %p43, %p44
      %s47 = sadd.s32 %s46, 1
      %p50 = scmp.eq.s32.totalorder %s17, 3
      %p51 = scmp.ne.s32.totalorder %s46, %s48
      %p52 = scmp.eq.s32.totalorder %s17, 0
      %p53 = por %p51, %p52
      %p54 = scmp.ne.s32.totalorder %s46, %s48
      %p55 = scmp.eq.s32.totalorder %s22, 3
      %p56 = por %p54, %p55
      %p57 = scmp.ne.s32.totalorder %s48, %s49
      %p58 = scmp.eq.s32.totalorder %s22, 0
      %p59 = por %p57, %p58
      %p60 = scmp.ne.s32.totalorder %s48, %s49
      %p61 = scmp.eq.s32.totalorder %s23, 3
      %p62 = por %p60, %p61
      %p64 = scmp.ne.s32.totalorder %s49, %s63
      %p65 = scmp.eq.s32.totalorder %s23, 0
      %p66 = por %p64, %p65
      %s67 = ssub.s32 %s17, %s24
      %p68 = scmp.eq.s32.totalorder %s67, 0
      %s70 = sadd.s32 %s69, 1
      %s71 = scalar_select %p68, %s69, %s70
      %p74 = pneg %p68
      %p75 = scmp.eq.s32.totalorder %s17, 3
      %p76 = por %p74, %p75
      %p77 = scmp.ne.s32.totalorder %s69, %s72
      %p78 = scmp.eq.s32.totalorder %s17, 0
      %p79 = por %p77, %p78
      %p80 = scmp.ne.s32.totalorder %s69, %s72
      %p81 = scmp.eq.s32.totalorder %s22, 3
      %p82 = por %p80, %p81
      %p83 = scmp.ne.s32.totalorder %s72, %s73
      %p84 = scmp.eq.s32.totalorder %s22, 0
      %p85 = por %p83, %p84
      %p86 = scmp.ne.s32.totalorder %s72, %s73
      %p87 = scmp.eq.s32.totalorder %s23, 3
      %p88 = por %p86, %p87
      %p90 = scmp.ne.s32.totalorder %s73, %s89
      %p91 = scmp.eq.s32.totalorder %s23, 0
      %p92 = por %p90, %p91
      %s93 = ssub.s32 %s17, %s24
      %p94 = scmp.eq.s32.totalorder %s93, 0
      %s96 = sadd.s32 %s95, 1
      %s97 = scalar_select %p94, %s95, %s96
      %p100 = pneg %p94
      %p101 = scmp.eq.s32.totalorder %s17, 3
      %p102 = por %p100, %p101
      %p103 = scmp.ne.s32.totalorder %s95, %s98
      %p104 = scmp.eq.s32.totalorder %s17, 0
      %p105 = por %p103, %p104
      %p106 = scmp.ne.s32.totalorder %s95, %s98
      %p107 = scmp.eq.s32.totalorder %s22, 3
      %p108 = por %p106, %p107
      %p109 = scmp.ne.s32.totalorder %s98, %s99
      %p110 = scmp.eq.s32.totalorder %s22, 0
      %p111 = por %p109, %p110
      %p112 = scmp.ne.s32.totalorder %s98, %s99
      %p113 = scmp.eq.s32.totalorder %s23, 3
      %p114 = por %p112, %p113
      %p116 = scmp.ne.s32.totalorder %s99, %s115
      %p117 = scmp.eq.s32.totalorder %s23, 0
      %p118 = por %p116, %p117
      %p119 = scmp.le.s32.totalorder 1, %s17
      %p120 = scmp.lt.s32.totalorder %s17, 5
      %p121 = pnand %p119, %p120
      %p122 = pneg %p121
      // Predicated region
      $region9: #{tpu_custom_call.1} parent=5 // pred_check
        _
      $region10: #{tpu_custom_call.1} parent=5 // pred_check_branch
        %124 = sbr.rel (%p121) target = $region12
      $region11: #{tpu_custom_call.1} parent=5 // pred_region
        %s125 = ssub.s32 %s17, 1
        // Predicated region
        $region13: #{tpu_custom_call.1} parent=11 // pred_check
          %p126 = pneg %p38
        $region14: #{tpu_custom_call.1} parent=11 // pred_check_branch
          %128 = sbr.rel (%p126) target = $region16
        $region15: #{tpu_custom_call.1} parent=11 // pred_region
          _
        $region16: #{tpu_custom_call.1} parent=11 // pred_fallthru
          _
        // Predicated region
        $region17: #{tpu_custom_call.1} parent=11 // pred_check
          %p129 = pneg %p59
        $region18: #{tpu_custom_call.1} parent=11 // pred_check_branch
          %131 = sbr.rel (%p129) target = $region20
        $region19: #{tpu_custom_call.1} parent=11 // pred_region
          _
        $region20: #{tpu_custom_call.1} parent=11 // pred_fallthru
          _
      $region12: #{tpu_custom_call.1} parent=5 // pred_fallthru
        _
      %p132 = scmp.lt.s32.totalorder %s17, 4
      // Predicated region
      $region21: #{tpu_custom_call.1} parent=5 // pred_check
        %p133 = pneg %p132
      $region22: #{tpu_custom_call.1} parent=5 // pred_check_branch
        %135 = sbr.rel (%p133) target = $region24
      $region23: #{tpu_custom_call.1} parent=5 // pred_region
        // Predicated region
        $region25: #{tpu_custom_call.1} parent=23 // pred_check
          %p136 = pneg %p79
        $region26: #{tpu_custom_call.1} parent=23 // pred_check_branch
          %138 = sbr.rel (%p136) target = $region28
        $region27: #{tpu_custom_call.1} parent=23 // pred_region
          %s139 = sand.u32 %s69, 1
          %s140 = scalar_lea.sflag [#allocation5], %s139
          %s141 = sand.u32 %s69, 1
          %s142 = smul.addr %s141, 256
          %s143 = scalar_lea.vmem [#allocation4], %s142
          %s144 = smul.u32 32, %s17
          %s146 = ssub.s32 4096, 4096
          %147 = vsyncadd %s140, %s146
          %s148 = smul.addr %s144, 128
          %s149 = scalar_lea.hbm %s2, %s148
          %s150 = sshll.u32 %s143, 4
          %s151 = int_to_ptr.vmem [resolvable:$true] %s150
          %156 = dma.hbm_to_vmem [thread:$0]  %s149, 4096, %s151, %s140, 128, 128, 8
        $region28: #{tpu_custom_call.1} parent=23 // pred_fallthru
          _
      $region24: #{tpu_custom_call.1} parent=5 // pred_fallthru
        _
      %p157 = scmp.le.s32.totalorder 1, %s17
      %p158 = scmp.lt.s32.totalorder %s17, 5
      %p159 = pnand %p157, %p158
      %p160 = pneg %p159
      // Predicated region
      $region29: #{tpu_custom_call.1} parent=5 // pred_check
        _
      $region30: #{tpu_custom_call.1} parent=5 // pred_check_branch
        %162 = sbr.rel (%p159) target = $region32
      $region31: #{tpu_custom_call.1} parent=5 // pred_region
        %s163 = ssub.s32 %s17, 1
        %s164 = sand.u32 %s72, 1
        %s165 = scalar_lea.sflag [#allocation5], %s164
        %s166 = sand.u32 %s72, 1
        %s167 = smul.addr %s166, 256
        %s168 = scalar_lea.vmem [#allocation4], %s167
        // Predicated region
        $region33: #{tpu_custom_call.1} parent=31 // pred_check
          %p169 = pneg %p85
        $region34: #{tpu_custom_call.1} parent=31 // pred_check_branch
          %171 = sbr.rel (%p169) target = $region36
        $region35: #{tpu_custom_call.1} parent=31 // pred_region
          %172 = dma.done %s165, 4096
        $region36: #{tpu_custom_call.1} parent=31 // pred_fallthru
          _
        %p173 = pneg %p38
        %p174 = pneg %p35
        %p175 = pneg %p59
        %p176 = pneg %p56
        %s177 = sand.u32 %s72, 1
        %s178 = scalar_lea.sflag [#allocation5], %s177
        %s179 = sand.u32 %s72, 1
        %s180 = smul.addr %s179, 256
        %s181 = scalar_lea.vmem [#allocation4], %s180
        %p182 = pneg %p85
        %p183 = pneg %p82
        %p184 = pneg %p111
        %p185 = pneg %p108
        %s186 = sand.u32 %s98, 1
        %s187 = scalar_lea.sflag [#allocation6], %s186
        %s188 = sand.u32 %s98, 1
        %s189 = smul.addr %s188, 256
        %s190 = scalar_lea.vmem [#allocation7], %s189
        %s191 = smul.u32 32, %s22
        %s192 = smul.u32 32, %s22
        %s193 = sld [smem:[#allocation2]]
        %s194 = sld [smem:[#allocation3]]
        %v195 = vld [vmem:[%s168] sm:$0xff]
        %v196 = vld [vmem:[%s168 + $0x8] sm:$0xff]
        %v197 = vld [vmem:[%s168 + $0x10] sm:$0xff]
        %v198 = vld [vmem:[%s168 + $0x18] sm:$0xff]
        %v199 = vld [vmem:[%s168 + $0x20] sm:$0xff]
        %v200 = vld [vmem:[%s168 + $0x28] sm:$0xff]
        %v201 = vld [vmem:[%s168 + $0x30] sm:$0xff]
        %v202 = vld [vmem:[%s168 + $0x38] sm:$0xff]
        %v203 = vld [vmem:[%s168 + $0x40] sm:$0xff]
        %v204 = vld [vmem:[%s168 + $0x48] sm:$0xff]
        %v205 = vld [vmem:[%s168 + $0x50] sm:$0xff]
        %v206 = vld [vmem:[%s168 + $0x58] sm:$0xff]
        %v207 = vld [vmem:[%s168 + $0x60] sm:$0xff]
        %v208 = vld [vmem:[%s168 + $0x68] sm:$0xff]
        %v209 = vld [vmem:[%s168 + $0x70] sm:$0xff]
        %v210 = vld [vmem:[%s168 + $0x78] sm:$0xff]
        %v211 = vld [vmem:[%s168 + $0x80] sm:$0xff]
        %v212 = vld [vmem:[%s168 + $0x88] sm:$0xff]
        %v213 = vld [vmem:[%s168 + $0x90] sm:$0xff]
        %v214 = vld [vmem:[%s168 + $0x98] sm:$0xff]
        %v215 = vld [vmem:[%s168 + $0xa0] sm:$0xff]
        %v216 = vld [vmem:[%s168 + $0xa8] sm:$0xff]
        %v217 = vld [vmem:[%s168 + $0xb0] sm:$0xff]
        %v218 = vld [vmem:[%s168 + $0xb8] sm:$0xff]
        %v219 = vld [vmem:[%s168 + $0xc0] sm:$0xff]
        %v220 = vld [vmem:[%s168 + $0xc8] sm:$0xff]
        %v221 = vld [vmem:[%s168 + $0xd0] sm:$0xff]
        %v222 = vld [vmem:[%s168 + $0xd8] sm:$0xff]
        %v223 = vld [vmem:[%s168 + $0xe0] sm:$0xff]
        %v224 = vld [vmem:[%s168 + $0xe8] sm:$0xff]
        %v225 = vld [vmem:[%s168 + $0xf0] sm:$0xff]
        %v226 = vld [vmem:[%s168 + $0xf8] sm:$0xff]
        %v227 = vstv %s193
        %v228 = vmul.f32 %v195, %v227
        %v229 = vmul.f32 %v196, %v227
        %v230 = vmul.f32 %v197, %v227
        %v231 = vmul.f32 %v198, %v227
        %v232 = vmul.f32 %v199, %v227
        %v233 = vmul.f32 %v200, %v227
        %v234 = vmul.f32 %v201, %v227
        %v235 = vmul.f32 %v202, %v227
        %v236 = vmul.f32 %v203, %v227
        %v237 = vmul.f32 %v204, %v227
        %v238 = vmul.f32 %v205, %v227
        %v239 = vmul.f32 %v206, %v227
        %v240 = vmul.f32 %v207, %v227
        %v241 = vmul.f32 %v208, %v227
        %v242 = vmul.f32 %v209, %v227
        %v243 = vmul.f32 %v210, %v227
        %v244 = vmul.f32 %v211, %v227
        %v245 = vmul.f32 %v212, %v227
        %v246 = vmul.f32 %v213, %v227
        %v247 = vmul.f32 %v214, %v227
        %v248 = vmul.f32 %v215, %v227
        %v249 = vmul.f32 %v216, %v227
        %v250 = vmul.f32 %v217, %v227
        %v251 = vmul.f32 %v218, %v227
        %v252 = vmul.f32 %v219, %v227
        %v253 = vmul.f32 %v220, %v227
        %v254 = vmul.f32 %v221, %v227
        %v255 = vmul.f32 %v222, %v227
        %v256 = vmul.f32 %v223, %v227
        %v257 = vmul.f32 %v224, %v227
        %v258 = vmul.f32 %v225, %v227
        %v259 = vmul.f32 %v226, %v227
        %v260 = vstv %s194
        %v261 = vadd.f32 %v228, %v260
        %v262 = vadd.f32 %v229, %v260
        %v263 = vadd.f32 %v230, %v260
        %v264 = vadd.f32 %v231, %v260
        %v265 = vadd.f32 %v232, %v260
        %v266 = vadd.f32 %v233, %v260
        %v267 = vadd.f32 %v234, %v260
        %v268 = vadd.f32 %v235, %v260
        %v269 = vadd.f32 %v236, %v260
        %v270 = vadd.f32 %v237, %v260
        %v271 = vadd.f32 %v238, %v260
        %v272 = vadd.f32 %v239, %v260
        %v273 = vadd.f32 %v240, %v260
        %v274 = vadd.f32 %v241, %v260
        %v275 = vadd.f32 %v242, %v260
        %v276 = vadd.f32 %v243, %v260
        %v277 = vadd.f32 %v244, %v260
        %v278 = vadd.f32 %v245, %v260
        %v279 = vadd.f32 %v246, %v260
        %v280 = vadd.f32 %v247, %v260
        %v281 = vadd.f32 %v248, %v260
        %v282 = vadd.f32 %v249, %v260
        %v283 = vadd.f32 %v250, %v260
        %v284 = vadd.f32 %v251, %v260
        %v285 = vadd.f32 %v252, %v260
        %v286 = vadd.f32 %v253, %v260
        %v287 = vadd.f32 %v254, %v260
        %v288 = vadd.f32 %v255, %v260
        %v289 = vadd.f32 %v256, %v260
        %v290 = vadd.f32 %v257, %v260
        %v291 = vadd.f32 %v258, %v260
        %v292 = vadd.f32 %v259, %v260
        %293 = vst [vmem:[%s190] sm:$0xff] %v261
        %294 = vst [vmem:[%s190 + $0x8] sm:$0xff] %v262
        %295 = vst [vmem:[%s190 + $0x10] sm:$0xff] %v263
        %296 = vst [vmem:[%s190 + $0x18] sm:$0xff] %v264
        %297 = vst [vmem:[%s190 + $0x20] sm:$0xff] %v265
        %298 = vst [vmem:[%s190 + $0x28] sm:$0xff] %v266
        %299 = vst [vmem:[%s190 + $0x30] sm:$0xff] %v267
        %300 = vst [vmem:[%s190 + $0x38] sm:$0xff] %v268
        %301 = vst [vmem:[%s190 + $0x40] sm:$0xff] %v269
        %302 = vst [vmem:[%s190 + $0x48] sm:$0xff] %v270
        %303 = vst [vmem:[%s190 + $0x50] sm:$0xff] %v271
        %304 = vst [vmem:[%s190 + $0x58] sm:$0xff] %v272
        %305 = vst [vmem:[%s190 + $0x60] sm:$0xff] %v273
        %306 = vst [vmem:[%s190 + $0x68] sm:$0xff] %v274
        %307 = vst [vmem:[%s190 + $0x70] sm:$0xff] %v275
        %308 = vst [vmem:[%s190 + $0x78] sm:$0xff] %v276
        %309 = vst [vmem:[%s190 + $0x80] sm:$0xff] %v277
        %310 = vst [vmem:[%s190 + $0x88] sm:$0xff] %v278
        %311 = vst [vmem:[%s190 + $0x90] sm:$0xff] %v279
        %312 = vst [vmem:[%s190 + $0x98] sm:$0xff] %v280
        %313 = vst [vmem:[%s190 + $0xa0] sm:$0xff] %v281
        %314 = vst [vmem:[%s190 + $0xa8] sm:$0xff] %v282
        %315 = vst [vmem:[%s190 + $0xb0] sm:$0xff] %v283
        %316 = vst [vmem:[%s190 + $0xb8] sm:$0xff] %v284
        %317 = vst [vmem:[%s190 + $0xc0] sm:$0xff] %v285
        %318 = vst [vmem:[%s190 + $0xc8] sm:$0xff] %v286
        %319 = vst [vmem:[%s190 + $0xd0] sm:$0xff] %v287
        %320 = vst [vmem:[%s190 + $0xd8] sm:$0xff] %v288
        %321 = vst [vmem:[%s190 + $0xe0] sm:$0xff] %v289
        %322 = vst [vmem:[%s190 + $0xe8] sm:$0xff] %v290
        %323 = vst [vmem:[%s190 + $0xf0] sm:$0xff] %v291
        %324 = vst [vmem:[%s190 + $0xf8] sm:$0xff] %v292
        %s325 = sand.u32 %s98, 1
        %s326 = scalar_lea.sflag [#allocation6], %s325
        %s327 = sand.u32 %s98, 1
        %s328 = smul.addr %s327, 256
        %s329 = scalar_lea.vmem [#allocation7], %s328
        // Predicated region
        $region37: #{tpu_custom_call.1} parent=31 // pred_check
          %p330 = pneg %p108
        $region38: #{tpu_custom_call.1} parent=31 // pred_check_branch
          %332 = sbr.rel (%p330) target = $region40
        $region39: #{tpu_custom_call.1} parent=31 // pred_region
          %s333 = smul.u32 32, %s22
          %s335 = ssub.s32 4096, 4096
          %336 = vsyncadd %s326, %s335
          %s337 = smul.addr %s333, 128
          %s338 = scalar_lea.hbm %s3, %s337
          %s339 = sshll.u32 %s329, 4
          %s340 = int_to_ptr.vmem [resolvable:$true] %s339
          %345 = dma.vmem_to_hbm [thread:$0]  %s340, 4096, %s338, %s326, 128, 128, 8
        $region40: #{tpu_custom_call.1} parent=31 // pred_fallthru
          _
      $region32: #{tpu_custom_call.1} parent=5 // pred_fallthru
        _
      %p346 = scmp.le.s32.totalorder 2, %s17
      // Predicated region
      $region41: #{tpu_custom_call.1} parent=5 // pred_check
        %p347 = pneg %p346
      $region42: #{tpu_custom_call.1} parent=5 // pred_check_branch
        %349 = sbr.rel (%p347) target = $region44
      $region43: #{tpu_custom_call.1} parent=5 // pred_region
        %s350 = ssub.s32 %s17, 2
        // Predicated region
        $region45: #{tpu_custom_call.1} parent=43 // pred_check
          %p351 = pneg %p114
        $region46: #{tpu_custom_call.1} parent=43 // pred_check_branch
          %353 = sbr.rel (%p351) target = $region48
        $region47: #{tpu_custom_call.1} parent=43 // pred_region
          %s354 = sand.u32 %s99, 1
          %s355 = scalar_lea.sflag [#allocation6], %s354
          %s356 = sand.u32 %s99, 1
          %s357 = smul.addr %s356, 256
          %s358 = scalar_lea.vmem [#allocation7], %s357
          %359 = dma.done %s355, 4096
        $region48: #{tpu_custom_call.1} parent=43 // pred_fallthru
          _
      $region44: #{tpu_custom_call.1} parent=5 // pred_fallthru
        _
    $region6: #{tpu_custom_call.1} parent=1 // loop_footer
      %s21 = sadd.s32 1, %s17
    $region7: #{tpu_custom_call.1} parent=1 // loop_footer_branch
      %16 = sbr.rel target = $region3
    $region8: #{tpu_custom_call.1} parent=1 // loop_exit
      _
    %360 = vsyncpa [#allocation5], 1
    %s361 = scalar_lea.sflag [#allocation5], 1
    %362 = vsyncpa %s361, 1
    %363 = vsyncpa [#allocation6], 1
    %s364 = scalar_lea.sflag [#allocation6], 1
    %365 = vsyncpa %s364, 1

</llo_original>
